<compile_context>
chip_gen: v6e
topology: v6e:2x2x1
jax: 0.10.0
libtpu: 0.0.40
codegen_flags: <defaults>
</compile_context>

<pallas_src>
import jax
import jax.numpy as jnp
from jax.experimental import pallas as pl
from jax.experimental.pallas import tpu as pltpu
import numpy as np


def _round_up(n, m):
    return ((n + m - 1) // m) * m


def _mlp_kernel(x_ref, w1_ref, b1_ref, w2_ref, b2_ref, w3_ref, b3_ref, o_ref):
    # fc1 + ReLU   (bf16 operands, f32 accumulation, f32 bias add)
    h1 = jnp.dot(x_ref[...], w1_ref[...], preferred_element_type=jnp.float32)
    h1 = jnp.maximum(h1 + b1_ref[...], 0.0).astype(w2_ref.dtype)
    # fc2 + ReLU
    h2 = jnp.dot(h1, w2_ref[...], preferred_element_type=jnp.float32)
    h2 = jnp.maximum(h2 + b2_ref[...], 0.0).astype(w3_ref.dtype)
    # fc3 (no activation), lane-dense (padded-to-128) output
    out = jnp.dot(h2, w3_ref[...], preferred_element_type=jnp.float32) + b3_ref[...]
    o_ref[...] = out.astype(o_ref.dtype)


def behavior_cloning_forward(x, params, *, compute_dtype=jnp.bfloat16,
                             batch_tile=128):
    """x: (B, C, H, W) or (B, D).  Returns (B, action_dim) in x's float dtype."""
    B = x.shape[0]
    x2d = x.reshape(B, -1)                     # x.view(x.size(0), -1)
    D = x2d.shape[1]
    w1, b1, w2, b2, w3, b3 = params
    action_dim = w3.shape[1]
    out_dtype = x2d.dtype if jnp.issubdtype(x2d.dtype, jnp.floating) else jnp.float32

    # --- lane-dense output: pad action_dim up to a multiple of 128 ----------
    n_pad = _round_up(action_dim, 128)
    if n_pad != action_dim:
        w3 = jnp.pad(w3, ((0, 0), (0, n_pad - action_dim)))
        b3 = jnp.pad(b3, ((0, 0), (0, n_pad - action_dim)))

    # --- dtype: bf16 weights/activations, f32 biases -------------------------
    x2d = x2d.astype(compute_dtype)
    w1 = w1.astype(compute_dtype)
    w2 = w2.astype(compute_dtype)
    w3 = w3.astype(compute_dtype)
    b1 = b1.astype(jnp.float32)
    b2 = b2.astype(jnp.float32)
    b3 = b3.astype(jnp.float32)

    # --- batch tiling: grid over rows, weights stay VMEM-resident ------------
    tb = batch_tile if B >= batch_tile else _round_up(B, 8)
    b_pad = _round_up(B, tb)
    if b_pad != B:
        x2d = jnp.pad(x2d, ((0, b_pad - B), (0, 0)))
    grid_b = b_pad // tb

    # Constant index map -> weight/bias blocks are identical for every grid
    # step, so they are DMA'd once and reused.
    const = lambda a: pl.BlockSpec(a.shape, lambda i: (0,) * a.ndim)

    out = pl.pallas_call(
        _mlp_kernel,
        out_shape=jax.ShapeDtypeStruct((b_pad, n_pad), out_dtype),
        grid_spec=pltpu.PrefetchScalarGridSpec(
            num_scalar_prefetch=0,
            grid=(grid_b,),
            in_specs=[
                pl.BlockSpec((tb, D), lambda i: (i, 0)),   # x tile (pipelined)
                const(w1), const(b1),
                const(w2), const(b2),
                const(w3), const(b3),
            ],
            out_specs=pl.BlockSpec((tb, n_pad), lambda i: (i, 0)),
        ),
        compiler_params=pltpu.CompilerParams(
            # batch axis is independent -> shard across TCs on v7x megacore.
            dimension_semantics=("parallel",),
        ),
    )(x2d, w1, b1, w2, b2, w3, b3)

    return out[:B, :action_dim]


def init_params(key, obs_dim, action_dim, hidden_dims=(128, 256),
                dtype=jnp.float32):
    """Init mimicking nn.Linear default U(-1/sqrt(fan_in), 1/sqrt(fan_in)).

    Weights are stored as (in_features, out_features); biases as (1, out)."""
    d_in = int(np.prod(obs_dim))
    dims = [d_in, hidden_dims[0], hidden_dims[1], action_dim]
    params = []
    for i in range(3):
        fan_in, fan_out = dims[i], dims[i + 1]
        key, kw, kb = jax.random.split(key, 3)
        bound = 1.0 / np.sqrt(fan_in)
        w = jax.random.uniform(kw, (fan_in, fan_out), dtype,
                               minval=-bound, maxval=bound)
        b = jax.random.uniform(kb, (1, fan_out), dtype,
                               minval=-bound, maxval=bound)
        params.extend([w, b])
    return tuple(params)


def reference_forward(x, params):
    """Pure-JAX f32 reference (mirrors the PyTorch forward)."""
    w1, b1, w2, b2, w3, b3 = params
    h = x.reshape(x.shape[0], -1)
    h = jnp.maximum(h @ w1 + b1, 0.0)
    h = jnp.maximum(h @ w2 + b2, 0.0)
    return h @ w3 + b3


if __name__ == "__main__":
    key = jax.random.PRNGKey(0)
    obs_dim = (4, 16, 16)        # C, H, W  -> flattened 1024
    action_dim = 8

    key, kp = jax.random.split(key)
    params = init_params(kp, obs_dim, action_dim)

    # --- small batch (grid of 1, padded to 8 rows) ---------------------------
    batch = 2
    key, kx = jax.random.split(key)
    x = jax.random.normal(kx, (batch,) + obs_dim, dtype=jnp.float32)
    out = jax.block_until_ready(behavior_cloning_forward(x, params))
    ref = reference_forward(x, params)
    assert out.shape == (batch, action_dim)
    # bf16 weights/activations (f32 accumulation) -> loose tolerance vs f32 ref
    np.testing.assert_allclose(np.asarray(out), np.asarray(ref),
                               rtol=5e-2, atol=2e-2)

    # --- larger batch exercises the batch grid / pipelined path --------------
    batch2 = 256
    key, kx2 = jax.random.split(key)
    x2 = jax.random.normal(kx2, (batch2,) + obs_dim, dtype=jnp.float32)
    out2 = jax.block_until_ready(behavior_cloning_forward(x2, params))
    ref2 = reference_forward(x2, params)
    assert out2.shape == (batch2, action_dim)
    np.testing.assert_allclose(np.asarray(out2), np.asarray(ref2),
                               rtol=5e-2, atol=2e-2)

    print("KERNEL_OK")
</pallas_src>

<mosaic_0001>
module attributes {stable_mosaic.version = 11 : i64} {
  func.func @_mlp_kernel(%arg0: i32, %arg1: memref<8x1024xbf16, #tpu.memory_space<vmem>>, %arg2: memref<1024x128xbf16, #tpu.memory_space<vmem>>, %arg3: memref<1x128xf32, #tpu.memory_space<vmem>>, %arg4: memref<128x256xbf16, #tpu.memory_space<vmem>>, %arg5: memref<1x256xf32, #tpu.memory_space<vmem>>, %arg6: memref<256x128xbf16, #tpu.memory_space<vmem>>, %arg7: memref<1x128xf32, #tpu.memory_space<vmem>>, %arg8: memref<8x128xf32, #tpu.memory_space<vmem>>) attributes {dimension_semantics = [#tpu.dimension_semantics<parallel>], iteration_bounds = array<i64: 1>, scalar_prefetch = 0 : i64, scratch_operands = 0 : i64, tpu.core_type = #tpu.core_type<tc>, window_params = [{transform_indices = @transform_0, window_bounds = array<i64: 8, 1024>}, {pipeline_mode = #tpu.pipeline_mode<synchronous>, transform_indices = @transform_1, window_bounds = array<i64: 1024, 128>}, {pipeline_mode = #tpu.pipeline_mode<synchronous>, transform_indices = @transform_2, window_bounds = array<i64: 1, 128>}, {pipeline_mode = #tpu.pipeline_mode<synchronous>, transform_indices = @transform_3, window_bounds = array<i64: 128, 256>}, {pipeline_mode = #tpu.pipeline_mode<synchronous>, transform_indices = @transform_4, window_bounds = array<i64: 1, 256>}, {pipeline_mode = #tpu.pipeline_mode<synchronous>, transform_indices = @transform_5, window_bounds = array<i64: 256, 128>}, {pipeline_mode = #tpu.pipeline_mode<synchronous>, transform_indices = @transform_6, window_bounds = array<i64: 1, 128>}, {transform_indices = @transform_7, window_bounds = array<i64: 8, 128>}]} {
    %c0 = arith.constant 0 : index
    %c0_0 = arith.constant 0 : index
    %0 = vector.load %arg1[%c0, %c0_0] : memref<8x1024xbf16, #tpu.memory_space<vmem>>, vector<8x1024xbf16>
    %c0_1 = arith.constant 0 : index
    %c0_2 = arith.constant 0 : index
    %1 = vector.load %arg2[%c0_1, %c0_2] : memref<1024x128xbf16, #tpu.memory_space<vmem>>, vector<1024x128xbf16>
    %cst = arith.constant dense<0.000000e+00> : vector<8x128xf32>
    %2 = tpu.matmul %0, %1, %cst {dimension_numbers = #tpu.dot_dimension_numbers<[1], [0], [0], [1], [0, 0, 1, 1], [], []>} : vector<8x1024xbf16>, vector<1024x128xbf16>, vector<8x128xf32> -> vector<8x128xf32>
    %c0_3 = arith.constant 0 : index
    %c0_4 = arith.constant 0 : index
    %3 = vector.load %arg3[%c0_3, %c0_4] : memref<1x128xf32, #tpu.memory_space<vmem>>, vector<1x128xf32>
    %4 = vector.broadcast %3 : vector<1x128xf32> to vector<8x128xf32>
    %5 = arith.addf %2, %4 : vector<8x128xf32>
    %cst_5 = arith.constant 0.000000e+00 : f32
    %6 = vector.broadcast %cst_5 : f32 to vector<8x128xf32>
    %7 = arith.maximumf %5, %6 : vector<8x128xf32>
    %8 = arith.truncf %7 : vector<8x128xf32> to vector<8x128xbf16>
    %c0_6 = arith.constant 0 : index
    %c0_7 = arith.constant 0 : index
    %9 = vector.load %arg4[%c0_6, %c0_7] : memref<128x256xbf16, #tpu.memory_space<vmem>>, vector<128x256xbf16>
    %cst_8 = arith.constant dense<0.000000e+00> : vector<8x256xf32>
    %10 = tpu.matmul %8, %9, %cst_8 {dimension_numbers = #tpu.dot_dimension_numbers<[1], [0], [0], [1], [0, 0, 1, 1], [], []>} : vector<8x128xbf16>, vector<128x256xbf16>, vector<8x256xf32> -> vector<8x256xf32>
    %c0_9 = arith.constant 0 : index
    %c0_10 = arith.constant 0 : index
    %11 = vector.load %arg5[%c0_9, %c0_10] : memref<1x256xf32, #tpu.memory_space<vmem>>, vector<1x256xf32>
    %12 = vector.broadcast %11 : vector<1x256xf32> to vector<8x256xf32>
    %13 = arith.addf %10, %12 : vector<8x256xf32>
    %cst_11 = arith.constant 0.000000e+00 : f32
    %14 = vector.broadcast %cst_11 : f32 to vector<8x256xf32>
    %15 = arith.maximumf %13, %14 : vector<8x256xf32>
    %16 = arith.truncf %15 : vector<8x256xf32> to vector<8x256xbf16>
    %c0_12 = arith.constant 0 : index
    %c0_13 = arith.constant 0 : index
    %17 = vector.load %arg6[%c0_12, %c0_13] : memref<256x128xbf16, #tpu.memory_space<vmem>>, vector<256x128xbf16>
    %cst_14 = arith.constant dense<0.000000e+00> : vector<8x128xf32>
    %18 = tpu.matmul %16, %17, %cst_14 {dimension_numbers = #tpu.dot_dimension_numbers<[1], [0], [0], [1], [0, 0, 1, 1], [], []>} : vector<8x256xbf16>, vector<256x128xbf16>, vector<8x128xf32> -> vector<8x128xf32>
    %c0_15 = arith.constant 0 : index
    %c0_16 = arith.constant 0 : index
    %19 = vector.load %arg7[%c0_15, %c0_16] : memref<1x128xf32, #tpu.memory_space<vmem>>, vector<1x128xf32>
    %20 = vector.broadcast %19 : vector<1x128xf32> to vector<8x128xf32>
    %21 = arith.addf %18, %20 : vector<8x128xf32>
    %c0_17 = arith.constant 0 : index
    %c0_18 = arith.constant 0 : index
    %22 = vector.load %arg8[%c0_17, %c0_18] : memref<8x128xf32, #tpu.memory_space<vmem>>, vector<8x128xf32>
    tpu.vector_store %arg8[%c0_17, %c0_18], %21 {strides = array<i32>} : memref<8x128xf32, #tpu.memory_space<vmem>>, vector<8x128xf32>,
    return
  }
  func.func @transform_0(%arg0: i32) -> (i32, i32) {
    %c0_i32 = arith.constant 0 : i32
    %c0_i32_0 = arith.constant 0 : i32
    return %arg0, %c0_i32 : i32, i32
  }
  func.func @transform_1(%arg0: i32) -> (i32, i32) {
    %c0_i32 = arith.constant 0 : i32
    %c0_i32_0 = arith.constant 0 : i32
    %c0_i32_1 = arith.constant 0 : i32
    return %c0_i32, %c0_i32_0 : i32, i32
  }
  func.func @transform_2(%arg0: i32) -> (i32, i32) {
    %c0_i32 = arith.constant 0 : i32
    %c0_i32_0 = arith.constant 0 : i32
    %c0_i32_1 = arith.constant 0 : i32
    return %c0_i32, %c0_i32_0 : i32, i32
  }
  func.func @transform_3(%arg0: i32) -> (i32, i32) {
    %c0_i32 = arith.constant 0 : i32
    %c0_i32_0 = arith.constant 0 : i32
    %c0_i32_1 = arith.constant 0 : i32
    return %c0_i32, %c0_i32_0 : i32, i32
  }
  func.func @transform_4(%arg0: i32) -> (i32, i32) {
    %c0_i32 = arith.constant 0 : i32
    %c0_i32_0 = arith.constant 0 : i32
    %c0_i32_1 = arith.constant 0 : i32
    return %c0_i32, %c0_i32_0 : i32, i32
  }
  func.func @transform_5(%arg0: i32) -> (i32, i32) {
    %c0_i32 = arith.constant 0 : i32
    %c0_i32_0 = arith.constant 0 : i32
    %c0_i32_1 = arith.constant 0 : i32
    return %c0_i32, %c0_i32_0 : i32, i32
  }
  func.func @transform_6(%arg0: i32) -> (i32, i32) {
    %c0_i32 = arith.constant 0 : i32
    %c0_i32_0 = arith.constant 0 : i32
    %c0_i32_1 = arith.constant 0 : i32
    return %c0_i32, %c0_i32_0 : i32, i32
  }
  func.func @transform_7(%arg0: i32) -> (i32, i32) {
    %c0_i32 = arith.constant 0 : i32
    %c0_i32_0 = arith.constant 0 : i32
    return %arg0, %c0_i32 : i32, i32
  }
}

</mosaic_0001>

<llo_original>
// kernel: tpu_custom_call.1
$region0: #{tpu_custom_call.1}
  #allocation0 [shape = 'u32[]', space=smem, size = 0x4, offset = 0x4, fixed_abs, tag = 'smem constant byte address 0x4 - core index']
  #allocation1 [shape = 'u32[144,128]{1,0:T(1,128)}', space=vmem, size = 0x12000, scoped, tag = 'internal scratch']
  %s0 = inlined_call_operand.hbm [shape: bf16[8,1024], index: 0, kind: input, shape index: {}]
  %s1 = inlined_call_operand.hbm [shape: bf16[1024,128], index: 1, kind: input, shape index: {}]
  %s2 = inlined_call_operand.vmem [shape: f32[1,128], index: 2, kind: input, shape index: {}]
  %s3 = inlined_call_operand.hbm [shape: bf16[128,256], index: 3, kind: input, shape index: {}]
  %s4 = inlined_call_operand.vmem [shape: f32[1,256], index: 4, kind: input, shape index: {}]
  %s5 = inlined_call_operand.hbm [shape: bf16[256,128], index: 5, kind: input, shape index: {}]
  %s6 = inlined_call_operand.vmem [shape: f32[1,128], index: 6, kind: input, shape index: {}]
  %s7 = inlined_call_operand.hbm [shape: f32[8,128], index: 7, kind: output, shape index: {}]
  %s8 = sld [smem:[#allocation0]]
  $region54: #{tpu_custom_call.1} parent=0
    _
  %s10 = ssub.s32 1, %s8
  %s11 = scalar_select 0, %s10, %s8
  $region1: #{tpu_custom_call.1} parent=0
    #allocation2 [shape = 'u8[16384]{0}', space=vmem, size = 0x4000, scoped, tag = 'input window, operand 0, single buffered']
    #allocation3 [shape = 's32[1]{0}', space=sflag, size = 0x4, scoped, tag = 'scoped memory for tpu_custom_call.1']
    #allocation4 [shape = 's32[1]{0}', space=sflag, size = 0x4, scoped, tag = 'scoped memory for tpu_custom_call.1']
    #allocation5 [shape = 'u8[262144]{0}', space=vmem, size = 0x40000, scoped, tag = 'input window, operand 1, single buffered']
    #allocation6 [shape = 's32[1]{0}', space=sflag, size = 0x4, scoped, tag = 'scoped memory for tpu_custom_call.1']
    #allocation7 [shape = 'u8[65536]{0}', space=vmem, size = 0x10000, scoped, tag = 'input window, operand 3, single buffered']
    #allocation8 [shape = 'u8[65536]{0}', space=vmem, size = 0x10000, scoped, tag = 'input window, operand 5, single buffered']
    #allocation9 [shape = 's32[1]{0}', space=sflag, size = 0x4, scoped, tag = 'scoped memory for tpu_custom_call.1']
    #allocation10 [shape = 'u8[4096]{0}', space=vmem, size = 0x1000, scoped, tag = 'output window, operand 0, single buffered']
    %12 = vsyncpa [#allocation3], 0
    %13 = vsyncpa [#allocation6], 0
    %14 = vsyncpa [#allocation9], 0
    %15 = vsyncpa [#allocation4], 0
    // Predicated region
    $region2: #{tpu_custom_call.1} parent=1 // pred_check
      _
    $region3: #{tpu_custom_call.1} parent=1 // pred_check_branch
      %17 = sbr.rel (0) target = $region5
    $region4: #{tpu_custom_call.1} parent=1 // pred_region
      %s19 = ssub.s32 512, 512
      %20 = vsyncadd [#allocation3], %s19
      %s22 = sshll.u32 [#allocation2], 4
      %s23 = int_to_ptr.vmem [resolvable:$true] %s22
      %25 = dma.hbm_to_vmem [thread:$0]  %s0, 512, %s23, [#allocation3]
    $region5: #{tpu_custom_call.1} parent=1 // pred_fallthru
      _
    // Predicated region
    $region6: #{tpu_custom_call.1} parent=1 // pred_check
      _
    $region7: #{tpu_custom_call.1} parent=1 // pred_check_branch
      %27 = sbr.rel (0) target = $region9
    $region8: #{tpu_custom_call.1} parent=1 // pred_region
      %s29 = ssub.s32 8192, 8192
      %30 = vsyncadd [#allocation6], %s29
      %s31 = sshll.u32 [#allocation5], 4
      %s32 = int_to_ptr.vmem [resolvable:$true] %s31
      %37 = dma.hbm_to_vmem [thread:$0]  %s1, 8192, %s32, [#allocation6], 64, 64, 4
    $region9: #{tpu_custom_call.1} parent=1 // pred_fallthru
      _
    // Predicated region
    $region10: #{tpu_custom_call.1} parent=1 // pred_check
      _
    $region11: #{tpu_custom_call.1} parent=1 // pred_check_branch
      %39 = sbr.rel (0) target = $region13
    $region12: #{tpu_custom_call.1} parent=1 // pred_region
      _
    $region13: #{tpu_custom_call.1} parent=1 // pred_fallthru
      _
    // Predicated region
    $region14: #{tpu_custom_call.1} parent=1 // pred_check
      _
    $region15: #{tpu_custom_call.1} parent=1 // pred_check_branch
      %41 = sbr.rel (0) target = $region17
    $region16: #{tpu_custom_call.1} parent=1 // pred_region
      %s43 = ssub.s32 2048, 2048
      %44 = vsyncadd [#allocation6], %s43
      %s45 = sshll.u32 [#allocation7], 4
      %s46 = int_to_ptr.vmem [resolvable:$true] %s45
      %51 = dma.hbm_to_vmem [thread:$0]  %s3, 2048, %s46, [#allocation6], 128, 128, 8
    $region17: #{tpu_custom_call.1} parent=1 // pred_fallthru
      _
    // Predicated region
    $region18: #{tpu_custom_call.1} parent=1 // pred_check
      _
    $region19: #{tpu_custom_call.1} parent=1 // pred_check_branch
      %53 = sbr.rel (0) target = $region21
    $region20: #{tpu_custom_call.1} parent=1 // pred_region
      _
    $region21: #{tpu_custom_call.1} parent=1 // pred_fallthru
      _
    // Predicated region
    $region22: #{tpu_custom_call.1} parent=1 // pred_check
      _
    $region23: #{tpu_custom_call.1} parent=1 // pred_check_branch
      %55 = sbr.rel (0) target = $region25
    $region24: #{tpu_custom_call.1} parent=1 // pred_region
      %s57 = ssub.s32 2048, 2048
      %58 = vsyncadd [#allocation9], %s57
      %s59 = sshll.u32 [#allocation8], 4
      %s60 = int_to_ptr.vmem [resolvable:$true] %s59
      %65 = dma.hbm_to_vmem [thread:$0]  %s5, 2048, %s60, [#allocation9], 64, 64, 4
    $region25: #{tpu_custom_call.1} parent=1 // pred_fallthru
      _
    // Predicated region
    $region26: #{tpu_custom_call.1} parent=1 // pred_check
      _
    $region27: #{tpu_custom_call.1} parent=1 // pred_check_branch
      %67 = sbr.rel (0) target = $region29
    $region28: #{tpu_custom_call.1} parent=1 // pred_region
      _
    $region29: #{tpu_custom_call.1} parent=1 // pred_fallthru
      _
    // Predicated region
    $region30: #{tpu_custom_call.1} parent=1 // pred_check
      _
    $region31: #{tpu_custom_call.1} parent=1 // pred_check_branch
      %69 = sbr.rel (0) target = $region33
    $region32: #{tpu_custom_call.1} parent=1 // pred_region
      %70 = dma.done [#allocation3], 512
    $region33: #{tpu_custom_call.1} parent=1 // pred_fallthru
      _
    // Predicated region
    $region34: #{tpu_custom_call.1} parent=1 // pred_check
      _
    $region35: #{tpu_custom_call.1} parent=1 // pred_check_branch
      %72 = sbr.rel (0) target = $region37
    $region36: #{tpu_custom_call.1} parent=1 // pred_region
      %73 = dma.done [#allocation6], 8192
    $region37: #{tpu_custom_call.1} parent=1 // pred_fallthru
      _
    // Predicated region
    $region38: #{tpu_custom_call.1} parent=1 // pred_check
      _
    $region39: #{tpu_custom_call.1} parent=1 // pred_check_branch
      %75 = sbr.rel (0) target = $region41
    $region40: #{tpu_custom_call.1} parent=1 // pred_region
      %76 = dma.done [#allocation6], 2048
    $region41: #{tpu_custom_call.1} parent=1 // pred_fallthru
      _
    // Predicated region
    $region42: #{tpu_custom_call.1} parent=1 // pred_check
      _
    $region43: #{tpu_custom_call.1} parent=1 // pred_check_branch
      %78 = sbr.rel (0) target = $region45
    $region44: #{tpu_custom_call.1} parent=1 // pred_region
      %79 = dma.done [#allocation9], 2048
    $region45: #{tpu_custom_call.1} parent=1 // pred_fallthru
      _
    %v81 = vld [vmem:[#allocation2] sm:$0xff]
    %v82 = vld [vmem:[#allocation2 + $0x8] sm:$0xff]
    %v83 = vld [vmem:[#allocation2 + $0x10] sm:$0xff]
    %v84 = vld [vmem:[#allocation2 + $0x18] sm:$0xff]
    %v85 = vld [vmem:[#allocation5] sm:$0xf]
    %v86 = vld [vmem:[#allocation5 + $0x4] sm:$0xf]
    %v87 = vld [vmem:[#allocation5 + $0x8] sm:$0xf]
    %v88 = vld [vmem:[#allocation5 + $0xc] sm:$0xf]
    %v89 = vld [vmem:[#allocation5 + $0x10] sm:$0xf]
    %v90 = vld [vmem:[#allocation5 + $0x14] sm:$0xf]
    %v91 = vld [vmem:[#allocation5 + $0x18] sm:$0xf]
    %v92 = vld [vmem:[#allocation5 + $0x1c] sm:$0xf]
    %v93 = vld [vmem:[#allocation5 + $0x20] sm:$0xf]
    %v94 = vld [vmem:[#allocation5 + $0x24] sm:$0xf]
    %v95 = vld [vmem:[#allocation5 + $0x28] sm:$0xf]
    %v96 = vld [vmem:[#allocation5 + $0x2c] sm:$0xf]
    %v97 = vld [vmem:[#allocation5 + $0x30] sm:$0xf]
    %v98 = vld [vmem:[#allocation5 + $0x34] sm:$0xf]
    %v99 = vld [vmem:[#allocation5 + $0x38] sm:$0xf]
    %v100 = vld [vmem:[#allocation5 + $0x3c] sm:$0xf]
    %v101 = vld [vmem:[#allocation5 + $0x40] sm:$0xf]
    %v102 = vld [vmem:[#allocation5 + $0x44] sm:$0xf]
    %v103 = vld [vmem:[#allocation5 + $0x48] sm:$0xf]
    %v104 = vld [vmem:[#allocation5 + $0x4c] sm:$0xf]
    %v105 = vld [vmem:[#allocation5 + $0x50] sm:$0xf]
    %v106 = vld [vmem:[#allocation5 + $0x54] sm:$0xf]
    %v107 = vld [vmem:[#allocation5 + $0x58] sm:$0xf]
    %v108 = vld [vmem:[#allocation5 + $0x5c] sm:$0xf]
    %v109 = vld [vmem:[#allocation5 + $0x60] sm:$0xf]
    %v110 = vld [vmem:[#allocation5 + $0x64] sm:$0xf]
    %v111 = vld [vmem:[#allocation5 + $0x68] sm:$0xf]
    %v112 = vld [vmem:[#allocation5 + $0x6c] sm:$0xf]
    %v113 = vld [vmem:[#allocation5 + $0x70] sm:$0xf]
    %v114 = vld [vmem:[#allocation5 + $0x74] sm:$0xf]
    %v115 = vld [vmem:[#allocation5 + $0x78] sm:$0xf]
    %v116 = vld [vmem:[#allocation5 + $0x7c] sm:$0xf]
    %v117 = vld [vmem:[#allocation5 + $0x80] sm:$0xf]
    %v118 = vld [vmem:[#allocation5 + $0x84] sm:$0xf]
    %v119 = vld [vmem:[#allocation5 + $0x88] sm:$0xf]
    %v120 = vld [vmem:[#allocation5 + $0x8c] sm:$0xf]
    %v121 = vld [vmem:[#allocation5 + $0x90] sm:$0xf]
    %v122 = vld [vmem:[#allocation5 + $0x94] sm:$0xf]
    %v123 = vld [vmem:[#allocation5 + $0x98] sm:$0xf]
    %v124 = vld [vmem:[#allocation5 + $0x9c] sm:$0xf]
    %v125 = vld [vmem:[#allocation5 + $0xa0] sm:$0xf]
    %v126 = vld [vmem:[#allocation5 + $0xa4] sm:$0xf]
    %v127 = vld [vmem:[#allocation5 + $0xa8] sm:$0xf]
    %v128 = vld [vmem:[#allocation5 + $0xac] sm:$0xf]
    %v129 = vld [vmem:[#allocation5 + $0xb0] sm:$0xf]
    %v130 = vld [vmem:[#allocation5 + $0xb4] sm:$0xf]
    %v131 = vld [vmem:[#allocation5 + $0xb8] sm:$0xf]
    %v132 = vld [vmem:[#allocation5 + $0xbc] sm:$0xf]
    %v133 = vld [vmem:[#allocation5 + $0xc0] sm:$0xf]
    %v134 = vld [vmem:[#allocation5 + $0xc4] sm:$0xf]
    %v135 = vld [vmem:[#allocation5 + $0xc8] sm:$0xf]
    %v136 = vld [vmem:[#allocation5 + $0xcc] sm:$0xf]
    %v137 = vld [vmem:[#allocation5 + $0xd0] sm:$0xf]
    %v138 = vld [vmem:[#allocation5 + $0xd4] sm:$0xf]
    %v139 = vld [vmem:[#allocation5 + $0xd8] sm:$0xf]
    %v140 = vld [vmem:[#allocation5 + $0xdc] sm:$0xf]
    %v141 = vld [vmem:[#allocation5 + $0xe0] sm:$0xf]
    %v142 = vld [vmem:[#allocation5 + $0xe4] sm:$0xf]
    %v143 = vld [vmem:[#allocation5 + $0xe8] sm:$0xf]
    %v144 = vld [vmem:[#allocation5 + $0xec] sm:$0xf]
    %v145 = vld [vmem:[#allocation5 + $0xf0] sm:$0xf]
    %v146 = vld [vmem:[#allocation5 + $0xf4] sm:$0xf]
    %v147 = vld [vmem:[#allocation5 + $0xf8] sm:$0xf]
    %v148 = vld [vmem:[#allocation5 + $0xfc] sm:$0xf]
    %v149 = vld [vmem:[#allocation5 + $0x100] sm:$0xf]
    %v150 = vld [vmem:[#allocation5 + $0x104] sm:$0xf]
    %v151 = vld [vmem:[#allocation5 + $0x108] sm:$0xf]
    %v152 = vld [vmem:[#allocation5 + $0x10c] sm:$0xf]
    %v153 = vld [vmem:[#allocation5 + $0x110] sm:$0xf]
    %v154 = vld [vmem:[#allocation5 + $0x114] sm:$0xf]
    %v155 = vld [vmem:[#allocation5 + $0x118] sm:$0xf]
    %v156 = vld [vmem:[#allocation5 + $0x11c] sm:$0xf]
    %v157 = vld [vmem:[#allocation5 + $0x120] sm:$0xf]
    %v158 = vld [vmem:[#allocation5 + $0x124] sm:$0xf]
    %v159 = vld [vmem:[#allocation5 + $0x128] sm:$0xf]
    %v160 = vld [vmem:[#allocation5 + $0x12c] sm:$0xf]
    %v161 = vld [vmem:[#allocation5 + $0x130] sm:$0xf]
    %v162 = vld [vmem:[#allocation5 + $0x134] sm:$0xf]
    %v163 = vld [vmem:[#allocation5 + $0x138] sm:$0xf]
    %v164 = vld [vmem:[#allocation5 + $0x13c] sm:$0xf]
    %v165 = vld [vmem:[#allocation5 + $0x140] sm:$0xf]
    %v166 = vld [vmem:[#allocation5 + $0x144] sm:$0xf]
    %v167 = vld [vmem:[#allocation5 + $0x148] sm:$0xf]
    %v168 = vld [vmem:[#allocation5 + $0x14c] sm:$0xf]
    %v169 = vld [vmem:[#allocation5 + $0x150] sm:$0xf]
    %v170 = vld [vmem:[#allocation5 + $0x154] sm:$0xf]
    %v171 = vld [vmem:[#allocation5 + $0x158] sm:$0xf]
    %v172 = vld [vmem:[#allocation5 + $0x15c] sm:$0xf]
    %v173 = vld [vmem:[#allocation5 + $0x160] sm:$0xf]
    %v174 = vld [vmem:[#allocation5 + $0x164] sm:$0xf]
    %v175 = vld [vmem:[#allocation5 + $0x168] sm:$0xf]
    %v176 = vld [vmem:[#allocation5 + $0x16c] sm:$0xf]
    %v177 = vld [vmem:[#allocation5 + $0x170] sm:$0xf]
    %v178 = vld [vmem:[#allocation5 + $0x174] sm:$0xf]
    %v179 = vld [vmem:[#allocation5 + $0x178] sm:$0xf]
    %v180 = vld [vmem:[#allocation5 + $0x17c] sm:$0xf]
    %v181 = vld [vmem:[#allocation5 + $0x180] sm:$0xf]
    %v182 = vld [vmem:[#allocation5 + $0x184] sm:$0xf]
    %v183 = vld [vmem:[#allocation5 + $0x188] sm:$0xf]
    %v184 = vld [vmem:[#allocation5 + $0x18c] sm:$0xf]
    %v185 = vld [vmem:[#allocation5 + $0x190] sm:$0xf]
    %v186 = vld [vmem:[#allocation5 + $0x194] sm:$0xf]
    %v187 = vld [vmem:[#allocation5 + $0x198] sm:$0xf]
    %v188 = vld [vmem:[#allocation5 + $0x19c] sm:$0xf]
    %v189 = vld [vmem:[#allocation5 + $0x1a0] sm:$0xf]
    %v190 = vld [vmem:[#allocation5 + $0x1a4] sm:$0xf]
    %v191 = vld [vmem:[#allocation5 + $0x1a8] sm:$0xf]
    %v192 = vld [vmem:[#allocation5 + $0x1ac] sm:$0xf]
    %v193 = vld [vmem:[#allocation5 + $0x1b0] sm:$0xf]
    %v194 = vld [vmem:[#allocation5 + $0x1b4] sm:$0xf]
    %v195 = vld [vmem:[#allocation5 + $0x1b8] sm:$0xf]
    %v196 = vld [vmem:[#allocation5 + $0x1bc] sm:$0xf]
    %v197 = vld [vmem:[#allocation5 + $0x1c0] sm:$0xf]
    %v198 = vld [vmem:[#allocation5 + $0x1c4] sm:$0xf]
    %v199 = vld [vmem:[#allocation5 + $0x1c8] sm:$0xf]
    %v200 = vld [vmem:[#allocation5 + $0x1cc] sm:$0xf]
    %v201 = vld [vmem:[#allocation5 + $0x1d0] sm:$0xf]
    %v202 = vld [vmem:[#allocation5 + $0x1d4] sm:$0xf]
    %v203 = vld [vmem:[#allocation5 + $0x1d8] sm:$0xf]
    %v204 = vld [vmem:[#allocation5 + $0x1dc] sm:$0xf]
    %v205 = vld [vmem:[#allocation5 + $0x1e0] sm:$0xf]
    %v206 = vld [vmem:[#allocation5 + $0x1e4] sm:$0xf]
    %v207 = vld [vmem:[#allocation5 + $0x1e8] sm:$0xf]
    %v208 = vld [vmem:[#allocation5 + $0x1ec] sm:$0xf]
    %v209 = vld [vmem:[#allocation5 + $0x1f0] sm:$0xf]
    %v210 = vld [vmem:[#allocation5 + $0x1f4] sm:$0xf]
    %v211 = vld [vmem:[#allocation5 + $0x1f8] sm:$0xf]
    %v212 = vld [vmem:[#allocation5 + $0x1fc] sm:$0xf]
    %v213 = vld [vmem:[%s2] sm:$0x1]
    %v215 = vlaneseq
    %v216 = vshrl.u32 %v215, 7
    %v217 = vsub.s32 0, %v216
    %v218 = vrot.slane %v213, %v217
    %v224 = vunpack.c.l.b16 %v81
    %v225 = vunpack.c.h.b16 %v81
    %v226 = vunpack.c.l.b16 %v82
    %v227 = vunpack.c.h.b16 %v82
    %v228 = vunpack.c.l.b16 %v83
    %v229 = vunpack.c.h.b16 %v83
    %v230 = vunpack.c.l.b16 %v84
    %v231 = vunpack.c.h.b16 %v84
    %v232 = vpack.c.b16 %v224, %v224
    %v233 = vpack.c.b16 %v225, %v225
    %v234 = vpack.c.b16 %v226, %v226
    %v235 = vpack.c.b16 %v227, %v227
    %v236 = vpack.c.b16 %v228, %v228
    %v237 = vpack.c.b16 %v229, %v229
    %v238 = vpack.c.b16 %v230, %v230
    %v239 = vpack.c.b16 %v231, %v231
    %v376 = vunpack.c.l.b16 %v85
    %v377 = vunpack.c.l.b16 %v86
    %v378 = vunpack.c.l.b16 %v87
    %v379 = vunpack.c.l.b16 %v88
    %v380 = vunpack.c.l.b16 %v89
    %v381 = vunpack.c.l.b16 %v90
    %v382 = vunpack.c.l.b16 %v91
    %v383 = vunpack.c.l.b16 %v92
    %v384 = vunpack.c.l.b16 %v93
    %v385 = vunpack.c.l.b16 %v94
    %v386 = vunpack.c.l.b16 %v95
    %v387 = vunpack.c.l.b16 %v96
    %v388 = vunpack.c.l.b16 %v97
    %v389 = vunpack.c.l.b16 %v98
    %v390 = vunpack.c.l.b16 %v99
    %v391 = vunpack.c.l.b16 %v100
    %v392 = vunpack.c.l.b16 %v101
    %v393 = vunpack.c.l.b16 %v102
    %v394 = vunpack.c.l.b16 %v103
    %v395 = vunpack.c.l.b16 %v104
    %v396 = vunpack.c.l.b16 %v105
    %v397 = vunpack.c.l.b16 %v106
    %v398 = vunpack.c.l.b16 %v107
    %v399 = vunpack.c.l.b16 %v108
    %v400 = vunpack.c.l.b16 %v109
    %v401 = vunpack.c.l.b16 %v110
    %v402 = vunpack.c.l.b16 %v111
    %v403 = vunpack.c.l.b16 %v112
    %v404 = vunpack.c.l.b16 %v113
    %v405 = vunpack.c.l.b16 %v114
    %v406 = vunpack.c.l.b16 %v115
    %v407 = vunpack.c.l.b16 %v116
    %v408 = vunpack.c.l.b16 %v117
    %v409 = vunpack.c.l.b16 %v118
    %v410 = vunpack.c.l.b16 %v119
    %v411 = vunpack.c.l.b16 %v120
    %v412 = vunpack.c.l.b16 %v121
    %v413 = vunpack.c.l.b16 %v122
    %v414 = vunpack.c.l.b16 %v123
    %v415 = vunpack.c.l.b16 %v124
    %v416 = vunpack.c.l.b16 %v125
    %v417 = vunpack.c.l.b16 %v126
    %v418 = vunpack.c.l.b16 %v127
    %v419 = vunpack.c.l.b16 %v128
    %v420 = vunpack.c.l.b16 %v129
    %v421 = vunpack.c.l.b16 %v130
    %v422 = vunpack.c.l.b16 %v131
    %v423 = vunpack.c.l.b16 %v132
    %v424 = vunpack.c.l.b16 %v133
    %v425 = vunpack.c.l.b16 %v134
    %v426 = vunpack.c.l.b16 %v135
    %v427 = vunpack.c.l.b16 %v136
    %v428 = vunpack.c.l.b16 %v137
    %v429 = vunpack.c.l.b16 %v138
    %v430 = vunpack.c.l.b16 %v139
    %v431 = vunpack.c.l.b16 %v140
    %v432 = vunpack.c.l.b16 %v141
    %v433 = vunpack.c.l.b16 %v142
    %v434 = vunpack.c.l.b16 %v143
    %v435 = vunpack.c.l.b16 %v144
    %v436 = vunpack.c.l.b16 %v145
    %v437 = vunpack.c.l.b16 %v146
    %v438 = vunpack.c.l.b16 %v147
    %v439 = vunpack.c.l.b16 %v148
    %v440 = vunpack.c.l.b16 %v149
    %v441 = vunpack.c.l.b16 %v150
    %v442 = vunpack.c.l.b16 %v151
    %v443 = vunpack.c.l.b16 %v152
    %v444 = vunpack.c.l.b16 %v153
    %v445 = vunpack.c.l.b16 %v154
    %v446 = vunpack.c.l.b16 %v155
    %v447 = vunpack.c.l.b16 %v156
    %v448 = vunpack.c.l.b16 %v157
    %v449 = vunpack.c.l.b16 %v158
    %v450 = vunpack.c.l.b16 %v159
    %v451 = vunpack.c.l.b16 %v160
    %v452 = vunpack.c.l.b16 %v161
    %v453 = vunpack.c.l.b16 %v162
    %v454 = vunpack.c.l.b16 %v163
    %v455 = vunpack.c.l.b16 %v164
    %v456 = vunpack.c.l.b16 %v165
    %v457 = vunpack.c.l.b16 %v166
    %v458 = vunpack.c.l.b16 %v167
    %v459 = vunpack.c.l.b16 %v168
    %v460 = vunpack.c.l.b16 %v169
    %v461 = vunpack.c.l.b16 %v170
    %v462 = vunpack.c.l.b16 %v171
    %v463 = vunpack.c.l.b16 %v172
    %v464 = vunpack.c.l.b16 %v173
    %v465 = vunpack.c.l.b16 %v174
    %v466 = vunpack.c.l.b16 %v175
    %v467 = vunpack.c.l.b16 %v176
    %v468 = vunpack.c.l.b16 %v177
    %v469 = vunpack.c.l.b16 %v178
    %v470 = vunpack.c.l.b16 %v179
    %v471 = vunpack.c.l.b16 %v180
    %v472 = vunpack.c.l.b16 %v181
    %v473 = vunpack.c.l.b16 %v182
    %v474 = vunpack.c.l.b16 %v183
    %v475 = vunpack.c.l.b16 %v184
    %v476 = vunpack.c.l.b16 %v185
    %v477 = vunpack.c.l.b16 %v186
    %v478 = vunpack.c.l.b16 %v187
    %v479 = vunpack.c.l.b16 %v188
    %v480 = vunpack.c.l.b16 %v189
    %v481 = vunpack.c.l.b16 %v190
    %v482 = vunpack.c.l.b16 %v191
    %v483 = vunpack.c.l.b16 %v192
    %v484 = vunpack.c.l.b16 %v193
    %v485 = vunpack.c.l.b16 %v194
    %v486 = vunpack.c.l.b16 %v195
    %v487 = vunpack.c.l.b16 %v196
    %v488 = vunpack.c.l.b16 %v197
    %v489 = vunpack.c.l.b16 %v198
    %v490 = vunpack.c.l.b16 %v199
    %v491 = vunpack.c.l.b16 %v200
    %v492 = vunpack.c.l.b16 %v201
    %v493 = vunpack.c.l.b16 %v202
    %v494 = vunpack.c.l.b16 %v203
    %v495 = vunpack.c.l.b16 %v204
    %v496 = vunpack.c.l.b16 %v205
    %v497 = vunpack.c.l.b16 %v206
    %v498 = vunpack.c.l.b16 %v207
    %v499 = vunpack.c.l.b16 %v208
    %v500 = vunpack.c.l.b16 %v209
    %v501 = vunpack.c.l.b16 %v210
    %v502 = vunpack.c.l.b16 %v211
    %v503 = vunpack.c.l.b16 %v212
    %v504 = vpack.c.b16 %v377, %v376
    %v505 = vpack.c.b16 %v379, %v378
    %v506 = vpack.c.b16 %v381, %v380
    %v507 = vpack.c.b16 %v383, %v382
    %v508 = vpack.c.b16 %v385, %v384
    %v509 = vpack.c.b16 %v387, %v386
    %v510 = vpack.c.b16 %v389, %v388
    %v511 = vpack.c.b16 %v391, %v390
    %v512 = vpack.c.b16 %v393, %v392
    %v513 = vpack.c.b16 %v395, %v394
    %v514 = vpack.c.b16 %v397, %v396
    %v515 = vpack.c.b16 %v399, %v398
    %v516 = vpack.c.b16 %v401, %v400
    %v517 = vpack.c.b16 %v403, %v402
    %v518 = vpack.c.b16 %v405, %v404
    %v519 = vpack.c.b16 %v407, %v406
    %v520 = vpack.c.b16 %v409, %v408
    %v521 = vpack.c.b16 %v411, %v410
    %v522 = vpack.c.b16 %v413, %v412
    %v523 = vpack.c.b16 %v415, %v414
    %v524 = vpack.c.b16 %v417, %v416
    %v525 = vpack.c.b16 %v419, %v418
    %v526 = vpack.c.b16 %v421, %v420
    %v527 = vpack.c.b16 %v423, %v422
    %v528 = vpack.c.b16 %v425, %v424
    %v529 = vpack.c.b16 %v427, %v426
    %v530 = vpack.c.b16 %v429, %v428
    %v531 = vpack.c.b16 %v431, %v430
    %v532 = vpack.c.b16 %v433, %v432
    %v533 = vpack.c.b16 %v435, %v434
    %v534 = vpack.c.b16 %v437, %v436
    %v535 = vpack.c.b16 %v439, %v438
    %v536 = vpack.c.b16 %v441, %v440
    %v537 = vpack.c.b16 %v443, %v442
    %v538 = vpack.c.b16 %v445, %v444
    %v539 = vpack.c.b16 %v447, %v446
    %v540 = vpack.c.b16 %v449, %v448
    %v541 = vpack.c.b16 %v451, %v450
    %v542 = vpack.c.b16 %v453, %v452
    %v543 = vpack.c.b16 %v455, %v454
    %v544 = vpack.c.b16 %v457, %v456
    %v545 = vpack.c.b16 %v459, %v458
    %v546 = vpack.c.b16 %v461, %v460
    %v547 = vpack.c.b16 %v463, %v462
    %v548 = vpack.c.b16 %v465, %v464
    %v549 = vpack.c.b16 %v467, %v466
    %v550 = vpack.c.b16 %v469, %v468
    %v551 = vpack.c.b16 %v471, %v470
    %v552 = vpack.c.b16 %v473, %v472
    %v553 = vpack.c.b16 %v475, %v474
    %v554 = vpack.c.b16 %v477, %v476
    %v555 = vpack.c.b16 %v479, %v478
    %v556 = vpack.c.b16 %v481, %v480
    %v557 = vpack.c.b16 %v483, %v482
    %v558 = vpack.c.b16 %v485, %v484
    %v559 = vpack.c.b16 %v487, %v486
    %v560 = vpack.c.b16 %v489, %v488
    %v561 = vpack.c.b16 %v491, %v490
    %v562 = vpack.c.b16 %v493, %v492
    %v563 = vpack.c.b16 %v495, %v494
    %v564 = vpack.c.b16 %v497, %v496
    %v565 = vpack.c.b16 %v499, %v498
    %v566 = vpack.c.b16 %v501, %v500
    %v567 = vpack.c.b16 %v503, %v502
    %632 = vmatprep.subr.bf16.mxu0 0
    %633 = vmatpush1.bf16.msra.mxu0 %v511
    %634 = vmatprep.subr.bf16.mxu0 0
    %635 = vmatpush1.bf16.msra.mxu0 %v510
    %636 = vmatprep.subr.bf16.mxu0 0
    %637 = vmatpush1.bf16.msra.mxu0 %v509
    %638 = vmatprep.subr.bf16.mxu0 0
    %639 = vmatpush1.bf16.msra.mxu0 %v508
    %640 = vmatprep.subr.bf16.mxu0 0
    %641 = vmatpush1.bf16.msra.mxu0 %v507
    %642 = vmatprep.subr.bf16.mxu0 0
    %643 = vmatpush1.bf16.msra.mxu0 %v506
    %644 = vmatprep.subr.bf16.mxu0 0
    %645 = vmatpush1.bf16.msra.mxu0 %v505
    %646 = vmatprep.subr.bf16.mxu0 0
    %647 = vmatpush1.bf16.msra.mxu0 %v504
    %648 = vmatprep.subr.bf16.mxu0 0
    %649 = vmatpush2.bf16.msra.mxu0 %v519
    %650 = vmatprep.subr.bf16.mxu0 0
    %651 = vmatpush2.bf16.msra.mxu0 %v518
    %652 = vmatprep.subr.bf16.mxu0 0
    %653 = vmatpush2.bf16.msra.mxu0 %v517
    %654 = vmatprep.subr.bf16.mxu0 0
    %655 = vmatpush2.bf16.msra.mxu0 %v516
    %656 = vmatprep.subr.bf16.mxu0 0
    %657 = vmatpush2.bf16.msra.mxu0 %v515
    %658 = vmatprep.subr.bf16.mxu0 0
    %659 = vmatpush2.bf16.msra.mxu0 %v514
    %660 = vmatprep.subr.bf16.mxu0 0
    %661 = vmatpush2.bf16.msra.mxu0 %v513
    %662 = vmatprep.subr.bf16.mxu0 0
    %663 = vmatpush2.bf16.msra.mxu0 %v512
    %664 = vmatprep.mubr.bf16.mxu0 %v233
    %665 = vmatmul.mubr.bf16.gmra.mxu0 %v232
    %v666 = vpop.f32.mrf.mxu0
    %v667 = vadd.f32 %v218, %v666
    %v668 = vpop.f32.mrf.mxu0
    %v669 = vpop.f32.mrf.mxu0
    %v670 = vpop.f32.mrf.mxu0
    %671 = vdwg.mxu0
    %672 = vmatprep.subr.bf16.mxu0 0
    %673 = vmatpush1.bf16.msra.mxu0 %v527
    %674 = vmatprep.subr.bf16.mxu0 0
    %675 = vmatpush1.bf16.msra.mxu0 %v526
    %676 = vmatprep.subr.bf16.mxu0 0
    %677 = vmatpush1.bf16.msra.mxu0 %v525
    %678 = vmatprep.subr.bf16.mxu0 0
    %679 = vmatpush1.bf16.msra.mxu0 %v524
    %680 = vmatprep.subr.bf16.mxu0 0
    %681 = vmatpush1.bf16.msra.mxu0 %v523
    %682 = vmatprep.subr.bf16.mxu0 0
    %683 = vmatpush1.bf16.msra.mxu0 %v522
    %684 = vmatprep.subr.bf16.mxu0 0
    %685 = vmatpush1.bf16.msra.mxu0 %v521
    %686 = vmatprep.subr.bf16.mxu0 0
    %687 = vmatpush1.bf16.msra.mxu0 %v520
    %688 = vmatprep.subr.bf16.mxu0 0
    %689 = vmatpush2.bf16.msra.mxu0 %v535
    %690 = vmatprep.subr.bf16.mxu0 0
    %691 = vmatpush2.bf16.msra.mxu0 %v534
    %692 = vmatprep.subr.bf16.mxu0 0
    %693 = vmatpush2.bf16.msra.mxu0 %v533
    %694 = vmatprep.subr.bf16.mxu0 0
    %695 = vmatpush2.bf16.msra.mxu0 %v532
    %696 = vmatprep.subr.bf16.mxu0 0
    %697 = vmatpush2.bf16.msra.mxu0 %v531
    %698 = vmatprep.subr.bf16.mxu0 0
    %699 = vmatpush2.bf16.msra.mxu0 %v530
    %700 = vmatprep.subr.bf16.mxu0 0
    %701 = vmatpush2.bf16.msra.mxu0 %v529
    %702 = vmatprep.subr.bf16.mxu0 0
    %703 = vmatpush2.bf16.msra.mxu0 %v528
    %704 = vmatprep.mubr.bf16.mxu0 %v235
    %705 = vmatmul.mubr.bf16.gmra.mxu0 %v234
    %v706 = vpop.f32.mrf.mxu0
    %v707 = vadd.f32 %v667, %v706
    %v708 = vpop.f32.mrf.mxu0
    %v709 = vpop.f32.mrf.mxu0
    %v710 = vpop.f32.mrf.mxu0
    %711 = vdwg.mxu0
    %712 = vmatprep.subr.bf16.mxu0 0
    %713 = vmatpush1.bf16.msra.mxu0 %v543
    %714 = vmatprep.subr.bf16.mxu0 0
    %715 = vmatpush1.bf16.msra.mxu0 %v542
    %716 = vmatprep.subr.bf16.mxu0 0
    %717 = vmatpush1.bf16.msra.mxu0 %v541
    %718 = vmatprep.subr.bf16.mxu0 0
    %719 = vmatpush1.bf16.msra.mxu0 %v540
    %720 = vmatprep.subr.bf16.mxu0 0
    %721 = vmatpush1.bf16.msra.mxu0 %v539
    %722 = vmatprep.subr.bf16.mxu0 0
    %723 = vmatpush1.bf16.msra.mxu0 %v538
    %724 = vmatprep.subr.bf16.mxu0 0
    %725 = vmatpush1.bf16.msra.mxu0 %v537
    %726 = vmatprep.subr.bf16.mxu0 0
    %727 = vmatpush1.bf16.msra.mxu0 %v536
    %728 = vmatprep.subr.bf16.mxu0 0
    %729 = vmatpush2.bf16.msra.mxu0 %v551
    %730 = vmatprep.subr.bf16.mxu0 0
    %731 = vmatpush2.bf16.msra.mxu0 %v550
    %732 = vmatprep.subr.bf16.mxu0 0
    %733 = vmatpush2.bf16.msra.mxu0 %v549
    %734 = vmatprep.subr.bf16.mxu0 0
    %735 = vmatpush2.bf16.msra.mxu0 %v548
    %736 = vmatprep.subr.bf16.mxu0 0
    %737 = vmatpush2.bf16.msra.mxu0 %v547
    %738 = vmatprep.subr.bf16.mxu0 0
    %739 = vmatpush2.bf16.msra.mxu0 %v546
    %740 = vmatprep.subr.bf16.mxu0 0
    %741 = vmatpush2.bf16.msra.mxu0 %v545
    %742 = vmatprep.subr.bf16.mxu0 0
    %743 = vmatpush2.bf16.msra.mxu0 %v544
    %744 = vmatprep.mubr.bf16.mxu0 %v237
    %745 = vmatmul.mubr.bf16.gmra.mxu0 %v236
    %v746 = vpop.f32.mrf.mxu0
    %v747 = vadd.f32 %v707, %v746
    %v748 = vpop.f32.mrf.mxu0
    %v749 = vpop.f32.mrf.mxu0
    %v750 = vpop.f32.mrf.mxu0
    %751 = vdwg.mxu0
    %752 = vmatprep.subr.bf16.mxu0 0
    %753 = vmatpush1.bf16.msra.mxu0 %v559
    %754 = vmatprep.subr.bf16.mxu0 0
    %755 = vmatpush1.bf16.msra.mxu0 %v558
    %756 = vmatprep.subr.bf16.mxu0 0
    %757 = vmatpush1.bf16.msra.mxu0 %v557
    %758 = vmatprep.subr.bf16.mxu0 0
    %759 = vmatpush1.bf16.msra.mxu0 %v556
    %760 = vmatprep.subr.bf16.mxu0 0
    %761 = vmatpush1.bf16.msra.mxu0 %v555
    %762 = vmatprep.subr.bf16.mxu0 0
    %763 = vmatpush1.bf16.msra.mxu0 %v554
    %764 = vmatprep.subr.bf16.mxu0 0
    %765 = vmatpush1.bf16.msra.mxu0 %v553
    %766 = vmatprep.subr.bf16.mxu0 0
    %767 = vmatpush1.bf16.msra.mxu0 %v552
    %768 = vmatprep.subr.bf16.mxu0 0
    %769 = vmatpush2.bf16.msra.mxu0 %v567
    %770 = vmatprep.subr.bf16.mxu0 0
    %771 = vmatpush2.bf16.msra.mxu0 %v566
    %772 = vmatprep.subr.bf16.mxu0 0
    %773 = vmatpush2.bf16.msra.mxu0 %v565
    %774 = vmatprep.subr.bf16.mxu0 0
    %775 = vmatpush2.bf16.msra.mxu0 %v564
    %776 = vmatprep.subr.bf16.mxu0 0
    %777 = vmatpush2.bf16.msra.mxu0 %v563
    %778 = vmatprep.subr.bf16.mxu0 0
    %779 = vmatpush2.bf16.msra.mxu0 %v562
    %780 = vmatprep.subr.bf16.mxu0 0
    %781 = vmatpush2.bf16.msra.mxu0 %v561
    %782 = vmatprep.subr.bf16.mxu0 0
    %783 = vmatpush2.bf16.msra.mxu0 %v560
    %784 = vmatprep.mubr.bf16.mxu0 %v239
    %785 = vmatmul.mubr.bf16.gmra.mxu0 %v238
    %v786 = vpop.f32.mrf.mxu0
    %v787 = vadd.f32 %v747, %v786
    %v788 = vpop.f32.mrf.mxu0
    %v789 = vpop.f32.mrf.mxu0
    %v790 = vpop.f32.mrf.mxu0
    %791 = vdwg.mxu0
    %v792 = vmax.f32 %v787, 0.0
    %v793 = vpack.c.bf16 %v792, %v792
    %v794 = vld [vmem:[#allocation7] sm:$0xff]
    %v795 = vld [vmem:[#allocation7 + $0x8] sm:$0xff]
    %v796 = vld [vmem:[#allocation7 + $0x10] sm:$0xff]
    %v797 = vld [vmem:[#allocation7 + $0x18] sm:$0xff]
    %v798 = vld [vmem:[#allocation7 + $0x20] sm:$0xff]
    %v799 = vld [vmem:[#allocation7 + $0x28] sm:$0xff]
    %v800 = vld [vmem:[#allocation7 + $0x30] sm:$0xff]
    %v801 = vld [vmem:[#allocation7 + $0x38] sm:$0xff]
    %v802 = vld [vmem:[#allocation7 + $0x40] sm:$0xff]
    %v803 = vld [vmem:[#allocation7 + $0x48] sm:$0xff]
    %v804 = vld [vmem:[#allocation7 + $0x50] sm:$0xff]
    %v805 = vld [vmem:[#allocation7 + $0x58] sm:$0xff]
    %v806 = vld [vmem:[#allocation7 + $0x60] sm:$0xff]
    %v807 = vld [vmem:[#allocation7 + $0x68] sm:$0xff]
    %v808 = vld [vmem:[#allocation7 + $0x70] sm:$0xff]
    %v809 = vld [vmem:[#allocation7 + $0x78] sm:$0xff]
    %v810 = vld [vmem:[%s4] sm:$0x3]
    %v812 = vlaneseq
    %v813 = vshrl.u32 %v812, 7
    %v814 = vsub.s32 0, %v813
    %v815 = vrot.slane %v810, %v814
    %v816 = vlaneseq
    %v817 = vshrl.u32 %v816, 7
    %v818 = vsub.s32 1, %v817
    %v819 = vrot.slane %v810, %v818
    %v838 = vunpack.c.l.b16 %v794
    %v839 = vunpack.c.h.b16 %v794
    %v840 = vunpack.c.l.b16 %v795
    %v841 = vunpack.c.h.b16 %v795
    %v842 = vunpack.c.l.b16 %v796
    %v843 = vunpack.c.h.b16 %v796
    %v844 = vunpack.c.l.b16 %v797
    %v845 = vunpack.c.h.b16 %v797
    %v846 = vunpack.c.l.b16 %v798
    %v847 = vunpack.c.h.b16 %v798
    %v848 = vunpack.c.l.b16 %v799
    %v849 = vunpack.c.h.b16 %v799
    %v850 = vunpack.c.l.b16 %v800
    %v851 = vunpack.c.h.b16 %v800
    %v852 = vunpack.c.l.b16 %v801
    %v853 = vunpack.c.h.b16 %v801
    %v854 = vunpack.c.l.b16 %v802
    %v855 = vunpack.c.h.b16 %v802
    %v856 = vunpack.c.l.b16 %v803
    %v857 = vunpack.c.h.b16 %v803
    %v858 = vunpack.c.l.b16 %v804
    %v859 = vunpack.c.h.b16 %v804
    %v860 = vunpack.c.l.b16 %v805
    %v861 = vunpack.c.h.b16 %v805
    %v862 = vunpack.c.l.b16 %v806
    %v863 = vunpack.c.h.b16 %v806
    %v864 = vunpack.c.l.b16 %v807
    %v865 = vunpack.c.h.b16 %v807
    %v866 = vunpack.c.l.b16 %v808
    %v867 = vunpack.c.h.b16 %v808
    %v868 = vunpack.c.l.b16 %v809
    %v869 = vunpack.c.h.b16 %v809
    %v870 = vpack.c.b16 %v840, %v838
    %v871 = vpack.c.b16 %v841, %v839
    %v872 = vpack.c.b16 %v844, %v842
    %v873 = vpack.c.b16 %v845, %v843
    %v874 = vpack.c.b16 %v848, %v846
    %v875 = vpack.c.b16 %v849, %v847
    %v876 = vpack.c.b16 %v852, %v850
    %v877 = vpack.c.b16 %v853, %v851
    %v878 = vpack.c.b16 %v856, %v854
    %v879 = vpack.c.b16 %v857, %v855
    %v880 = vpack.c.b16 %v860, %v858
    %v881 = vpack.c.b16 %v861, %v859
    %v882 = vpack.c.b16 %v864, %v862
    %v883 = vpack.c.b16 %v865, %v863
    %v884 = vpack.c.b16 %v868, %v866
    %v885 = vpack.c.b16 %v869, %v867
    %902 = vmatprep.subr.bf16.mxu0 %v885
    %903 = vmatpush1.bf16.msra.mxu0 %v884
    %904 = vmatprep.subr.bf16.mxu0 %v883
    %905 = vmatpush1.bf16.msra.mxu0 %v882
    %906 = vmatprep.subr.bf16.mxu0 %v881
    %907 = vmatpush1.bf16.msra.mxu0 %v880
    %908 = vmatprep.subr.bf16.mxu0 %v879
    %909 = vmatpush1.bf16.msra.mxu0 %v878
    %910 = vmatprep.subr.bf16.mxu0 %v877
    %911 = vmatpush1.bf16.msra.mxu0 %v876
    %912 = vmatprep.subr.bf16.mxu0 %v875
    %913 = vmatpush1.bf16.msra.mxu0 %v874
    %914 = vmatprep.subr.bf16.mxu0 %v873
    %915 = vmatpush1.bf16.msra.mxu0 %v872
    %916 = vmatprep.subr.bf16.mxu0 %v871
    %917 = vmatpush1.bf16.msra.mxu0 %v870
    %918 = vmatprep.subr.bf16.mxu0 0
    %919 = vmatpush2.bf16.msra.mxu0 0
    %920 = vmatprep.subr.bf16.mxu0 0
    %921 = vmatpush2.bf16.msra.mxu0 0
    %922 = vmatprep.subr.bf16.mxu0 0
    %923 = vmatpush2.bf16.msra.mxu0 0
    %924 = vmatprep.subr.bf16.mxu0 0
    %925 = vmatpush2.bf16.msra.mxu0 0
    %926 = vmatprep.subr.bf16.mxu0 0
    %927 = vmatpush2.bf16.msra.mxu0 0
    %928 = vmatprep.subr.bf16.mxu0 0
    %929 = vmatpush2.bf16.msra.mxu0 0
    %930 = vmatprep.subr.bf16.mxu0 0
    %931 = vmatpush2.bf16.msra.mxu0 0
    %932 = vmatprep.subr.bf16.mxu0 0
    %933 = vmatpush2.bf16.msra.mxu0 0
    %934 = vmatprep.mubr.bf16.mxu0 0
    %935 = vmatmul.mubr.bf16.gmra.mxu0 %v793
    %v936 = vpop.f32.mrf.mxu0
    %v937 = vadd.f32 %v815, %v936
    %v938 = vpop.f32.mrf.mxu0
    %v939 = vadd.f32 %v819, %v938
    %v940 = vpop.f32.mrf.mxu0
    %v941 = vpop.f32.mrf.mxu0
    %942 = vdwg.mxu0
    %v943 = vmax.f32 %v937, 0.0
    %v944 = vmax.f32 %v939, 0.0
    %v945 = vpack.c.bf16 %v943, %v943
    %v946 = vpack.c.bf16 %v944, %v944
    %v947 = vld [vmem:[#allocation8] sm:$0xf]
    %v948 = vld [vmem:[#allocation8 + $0x4] sm:$0xf]
    %v949 = vld [vmem:[#allocation8 + $0x8] sm:$0xf]
    %v950 = vld [vmem:[#allocation8 + $0xc] sm:$0xf]
    %v951 = vld [vmem:[#allocation8 + $0x10] sm:$0xf]
    %v952 = vld [vmem:[#allocation8 + $0x14] sm:$0xf]
    %v953 = vld [vmem:[#allocation8 + $0x18] sm:$0xf]
    %v954 = vld [vmem:[#allocation8 + $0x1c] sm:$0xf]
    %v955 = vld [vmem:[#allocation8 + $0x20] sm:$0xf]
    %v956 = vld [vmem:[#allocation8 + $0x24] sm:$0xf]
    %v957 = vld [vmem:[#allocation8 + $0x28] sm:$0xf]
    %v958 = vld [vmem:[#allocation8 + $0x2c] sm:$0xf]
    %v959 = vld [vmem:[#allocation8 + $0x30] sm:$0xf]
    %v960 = vld [vmem:[#allocation8 + $0x34] sm:$0xf]
    %v961 = vld [vmem:[#allocation8 + $0x38] sm:$0xf]
    %v962 = vld [vmem:[#allocation8 + $0x3c] sm:$0xf]
    %v963 = vld [vmem:[#allocation8 + $0x40] sm:$0xf]
    %v964 = vld [vmem:[#allocation8 + $0x44] sm:$0xf]
    %v965 = vld [vmem:[#allocation8 + $0x48] sm:$0xf]
    %v966 = vld [vmem:[#allocation8 + $0x4c] sm:$0xf]
    %v967 = vld [vmem:[#allocation8 + $0x50] sm:$0xf]
    %v968 = vld [vmem:[#allocation8 + $0x54] sm:$0xf]
    %v969 = vld [vmem:[#allocation8 + $0x58] sm:$0xf]
    %v970 = vld [vmem:[#allocation8 + $0x5c] sm:$0xf]
    %v971 = vld [vmem:[#allocation8 + $0x60] sm:$0xf]
    %v972 = vld [vmem:[#allocation8 + $0x64] sm:$0xf]
    %v973 = vld [vmem:[#allocation8 + $0x68] sm:$0xf]
    %v974 = vld [vmem:[#allocation8 + $0x6c] sm:$0xf]
    %v975 = vld [vmem:[#allocation8 + $0x70] sm:$0xf]
    %v976 = vld [vmem:[#allocation8 + $0x74] sm:$0xf]
    %v977 = vld [vmem:[#allocation8 + $0x78] sm:$0xf]
    %v978 = vld [vmem:[#allocation8 + $0x7c] sm:$0xf]
    %v979 = vld [vmem:[%s6] sm:$0x1]
    %v981 = vlaneseq
    %v982 = vshrl.u32 %v981, 7
    %v983 = vsub.s32 0, %v982
    %v984 = vrot.slane %v979, %v983
    %v1018 = vunpack.c.l.b16 %v947
    %v1019 = vunpack.c.l.b16 %v948
    %v1020 = vunpack.c.l.b16 %v949
    %v1021 = vunpack.c.l.b16 %v950
    %v1022 = vunpack.c.l.b16 %v951
    %v1023 = vunpack.c.l.b16 %v952
    %v1024 = vunpack.c.l.b16 %v953
    %v1025 = vunpack.c.l.b16 %v954
    %v1026 = vunpack.c.l.b16 %v955
    %v1027 = vunpack.c.l.b16 %v956
    %v1028 = vunpack.c.l.b16 %v957
    %v1029 = vunpack.c.l.b16 %v958
    %v1030 = vunpack.c.l.b16 %v959
    %v1031 = vunpack.c.l.b16 %v960
    %v1032 = vunpack.c.l.b16 %v961
    %v1033 = vunpack.c.l.b16 %v962
    %v1034 = vunpack.c.l.b16 %v963
    %v1035 = vunpack.c.l.b16 %v964
    %v1036 = vunpack.c.l.b16 %v965
    %v1037 = vunpack.c.l.b16 %v966
    %v1038 = vunpack.c.l.b16 %v967
    %v1039 = vunpack.c.l.b16 %v968
    %v1040 = vunpack.c.l.b16 %v969
    %v1041 = vunpack.c.l.b16 %v970
    %v1042 = vunpack.c.l.b16 %v971
    %v1043 = vunpack.c.l.b16 %v972
    %v1044 = vunpack.c.l.b16 %v973
    %v1045 = vunpack.c.l.b16 %v974
    %v1046 = vunpack.c.l.b16 %v975
    %v1047 = vunpack.c.l.b16 %v976
    %v1048 = vunpack.c.l.b16 %v977
    %v1049 = vunpack.c.l.b16 %v978
    %v1050 = vpack.c.b16 %v1019, %v1018
    %v1051 = vpack.c.b16 %v1021, %v1020
    %v1052 = vpack.c.b16 %v1023, %v1022
    %v1053 = vpack.c.b16 %v1025, %v1024
    %v1054 = vpack.c.b16 %v1027, %v1026
    %v1055 = vpack.c.b16 %v1029, %v1028
    %v1056 = vpack.c.b16 %v1031, %v1030
    %v1057 = vpack.c.b16 %v1033, %v1032
    %v1058 = vpack.c.b16 %v1035, %v1034
    %v1059 = vpack.c.b16 %v1037, %v1036
    %v1060 = vpack.c.b16 %v1039, %v1038
    %v1061 = vpack.c.b16 %v1041, %v1040
    %v1062 = vpack.c.b16 %v1043, %v1042
    %v1063 = vpack.c.b16 %v1045, %v1044
    %v1064 = vpack.c.b16 %v1047, %v1046
    %v1065 = vpack.c.b16 %v1049, %v1048
    %1082 = vmatprep.subr.bf16.mxu0 0
    %1083 = vmatpush1.bf16.msra.mxu0 %v1057
    %1084 = vmatprep.subr.bf16.mxu0 0
    %1085 = vmatpush1.bf16.msra.mxu0 %v1056
    %1086 = vmatprep.subr.bf16.mxu0 0
    %1087 = vmatpush1.bf16.msra.mxu0 %v1055
    %1088 = vmatprep.subr.bf16.mxu0 0
    %1089 = vmatpush1.bf16.msra.mxu0 %v1054
    %1090 = vmatprep.subr.bf16.mxu0 0
    %1091 = vmatpush1.bf16.msra.mxu0 %v1053
    %1092 = vmatprep.subr.bf16.mxu0 0
    %1093 = vmatpush1.bf16.msra.mxu0 %v1052
    %1094 = vmatprep.subr.bf16.mxu0 0
    %1095 = vmatpush1.bf16.msra.mxu0 %v1051
    %1096 = vmatprep.subr.bf16.mxu0 0
    %1097 = vmatpush1.bf16.msra.mxu0 %v1050
    %1098 = vmatprep.subr.bf16.mxu0 0
    %1099 = vmatpush2.bf16.msra.mxu0 %v1065
    %1100 = vmatprep.subr.bf16.mxu0 0
    %1101 = vmatpush2.bf16.msra.mxu0 %v1064
    %1102 = vmatprep.subr.bf16.mxu0 0
    %1103 = vmatpush2.bf16.msra.mxu0 %v1063
    %1104 = vmatprep.subr.bf16.mxu0 0
    %1105 = vmatpush2.bf16.msra.mxu0 %v1062
    %1106 = vmatprep.subr.bf16.mxu0 0
    %1107 = vmatpush2.bf16.msra.mxu0 %v1061
    %1108 = vmatprep.subr.bf16.mxu0 0
    %1109 = vmatpush2.bf16.msra.mxu0 %v1060
    %1110 = vmatprep.subr.bf16.mxu0 0
    %1111 = vmatpush2.bf16.msra.mxu0 %v1059
    %1112 = vmatprep.subr.bf16.mxu0 0
    %1113 = vmatpush2.bf16.msra.mxu0 %v1058
    %1114 = vmatprep.mubr.bf16.mxu0 %v946
    %1115 = vmatmul.mubr.bf16.gmra.mxu0 %v945
    %v1116 = vpop.f32.mrf.mxu0
    %v1117 = vadd.f32 %v984, %v1116
    %v1118 = vpop.f32.mrf.mxu0
    %v1119 = vpop.f32.mrf.mxu0
    %v1120 = vpop.f32.mrf.mxu0
    %1121 = vdwg.mxu0
    %1122 = vst [vmem:[#allocation10] sm:$0xff] %v1117
    // Predicated region
    $region46: #{tpu_custom_call.1} parent=1 // pred_check
      _
    $region47: #{tpu_custom_call.1} parent=1 // pred_check_branch
      %1124 = sbr.rel (0) target = $region49
    $region48: #{tpu_custom_call.1} parent=1 // pred_region
      %s1126 = ssub.s32 128, 128
      %1127 = vsyncadd [#allocation4], %s1126
      %s1129 = sshll.u32 [#allocation10], 4
      %s1130 = int_to_ptr.vmem [resolvable:$true] %s1129
      %1132 = dma.vmem_to_hbm [thread:$0]  %s1130, 128, %s7, [#allocation4]
    $region49: #{tpu_custom_call.1} parent=1 // pred_fallthru
      _
    // Predicated region
    $region50: #{tpu_custom_call.1} parent=1 // pred_check
      _
    $region51: #{tpu_custom_call.1} parent=1 // pred_check_branch
      %1134 = sbr.rel (0) target = $region53
    $region52: #{tpu_custom_call.1} parent=1 // pred_region
      %1135 = dma.done [#allocation4], 128
    $region53: #{tpu_custom_call.1} parent=1 // pred_fallthru
      _
    %1136 = vsyncpa [#allocation3], 1
    %1137 = vsyncpa [#allocation6], 1
    %1138 = vsyncpa [#allocation9], 1
    %1139 = vsyncpa [#allocation4], 1

</llo_original>
